<compile_context>
chip_gen: v6e
topology: v6e:2x2x1
jax: 0.10.0
libtpu: 0.0.40
codegen_flags: <defaults>
</compile_context>

<pallas_src>
import math
import functools

import jax
import jax.numpy as jnp
from jax import lax
from jax.experimental import pallas as pl
from jax.experimental.pallas import tpu as pltpu

# Hidden sizes fixed by the module (Linear(S,128)-Tanh-Linear(128,64)-Tanh-Linear(64,.)).
H1 = 128
H2 = 64
OUT_LANES = 128          # packed layer-3 / output width (lane-dense)
VAL_LANE = 126           # lane holding the critic state value
QUAD_LANE = 127          # lane holding sum(diff^2 * inv_var)


def _round_up(x, m):
    return ((x + m - 1) // m) * m


# -----------------------------------------------------------------------------
# Kernel: fused actor+critic (3 packed matmuls) + Gaussian quadratic form.
# One grid axis over the batch; weights/biases stay VMEM-resident across tiles.
# -----------------------------------------------------------------------------
def actor_critic_fused_kernel(
    state_ref, action_ref, inv_var_ref,
    w1_ref, b1_ref, w2_ref, b2_ref, w3_ref, b3_ref,
    out_ref,
    *, action_dim,
):
    x = state_ref[...]                                               # [TB, S]
    w1 = w1_ref[...]                                                 # [S, 2*H1]
    w2 = w2_ref[...]                                                 # [2*H1, 2*H2]
    w3 = w3_ref[...]                                                 # [2*H2, 128]

    # Layer 1: shared input, actor|critic concatenated along lanes.
    h1 = jnp.tanh(jnp.dot(x, w1, preferred_element_type=jnp.float32) + b1_ref[...])
    h1 = h1.astype(w2.dtype)
    # Layer 2: block-diagonal packed weights.
    h2 = jnp.tanh(jnp.dot(h1, w2, preferred_element_type=jnp.float32) + b2_ref[...])
    h2 = h2.astype(w3.dtype)
    # Layer 3: lanes 0..A-1 = actor pre-tanh, lane VAL_LANE = critic value,
    # all remaining lanes are exactly 0 (zero weights + zero biases).
    z3 = jnp.dot(h2, w3, preferred_element_type=jnp.float32) + b3_ref[...]   # [TB, 128]

    lane = lax.broadcasted_iota(jnp.int32, z3.shape, dimension=1)
    # Actor mean gets the final Tanh; critic value (and zero lanes) stay linear.
    slab = jnp.where(lane < action_dim, jnp.tanh(z3), z3)                    # [TB, 128]

    # Diagonal-Gaussian quadratic form: inv_var is zero outside lanes 0..A-1,
    # so padded lanes and the value lane contribute nothing.
    diff = action_ref[...] - slab
    quad = jnp.sum(diff * diff * inv_var_ref[...], axis=-1, keepdims=True)   # [TB, 1]

    out_ref[...] = jnp.where(lane == QUAD_LANE, quad, slab)


# -----------------------------------------------------------------------------
# One-time parameter packing (outside the per-call path).
# Weights are stored as [in, out] (PyTorch weight.T); biases stay f32.
# -----------------------------------------------------------------------------
def pack_params(p, state_dim, action_dim, compute_dtype=jnp.float32):
    A = action_dim
    assert A <= VAL_LANE, "action_dim must fit below the value lane"

    w1p = jnp.concatenate([p["aw1"], p["cw1"]], axis=1)              # [S, 256]
    b1p = jnp.concatenate([p["ab1"], p["cb1"]], axis=1)              # [1, 256]

    w2p = jnp.zeros((2 * H1, 2 * H2), jnp.float32)
    w2p = w2p.at[:H1, :H2].set(p["aw2"]).at[H1:, H2:].set(p["cw2"])  # [256, 128]
    b2p = jnp.concatenate([p["ab2"], p["cb2"]], axis=1)              # [1, 128]

    w3p = jnp.zeros((2 * H2, OUT_LANES), jnp.float32)
    w3p = w3p.at[:H2, :A].set(p["aw3"])
    w3p = w3p.at[H2:, VAL_LANE:VAL_LANE + 1].set(p["cw3"])           # [128, 128]
    b3p = jnp.zeros((1, OUT_LANES), jnp.float32)
    b3p = b3p.at[:, :A].set(p["ab3"])
    b3p = b3p.at[:, VAL_LANE:VAL_LANE + 1].set(p["cb3"])             # [1, 128]

    return dict(
        w1p=w1p.astype(compute_dtype), b1p=b1p,
        w2p=w2p.astype(compute_dtype), b2p=b2p,
        w3p=w3p.astype(compute_dtype), b3p=b3p,
    )


# -----------------------------------------------------------------------------
# Wrapper: Pallas-backed equivalent of ActorCritic.evaluate(state, action).
# Returns (action_logprobs [B], state_value [B], dist_entropy [B], action_mean [B, A]).
# -----------------------------------------------------------------------------
@functools.partial(jax.jit, static_argnames=("tb",))
def actor_critic_evaluate(state, action, packed, action_var, *, tb=512):
    B, S = state.shape
    A = action.shape[1]
    compute_dtype = packed["w1p"].dtype

    # Batch tile: TB <= tb, multiple of 8; pad B up to a multiple of TB.
    # tb=512 keeps per-tile VMEM ~1-2 MiB (comfortable even on v7x's 64 MiB).
    TB = min(tb, _round_up(B, 8))
    Bp = _round_up(B, TB)

    state_p = jnp.pad(state.astype(compute_dtype), ((0, Bp - B), (0, 0)))
    action_p = jnp.pad(action.astype(jnp.float32),
                       ((0, Bp - B), (0, OUT_LANES - A)))
    inv_var_p = jnp.zeros((1, OUT_LANES), jnp.float32).at[0, :A].set(1.0 / action_var)

    grid = (Bp // TB,)
    resident = lambda i: (0, 0)   # weights/biases/inv_var stay in VMEM across tiles

    out = pl.pallas_call(
        functools.partial(actor_critic_fused_kernel, action_dim=A),
        out_shape=jax.ShapeDtypeStruct((Bp, OUT_LANES), jnp.float32),
        grid=grid,
        in_specs=[
            pl.BlockSpec((TB, S), lambda i: (i, 0)),           # state tile
            pl.BlockSpec((TB, OUT_LANES), lambda i: (i, 0)),   # padded action tile
            pl.BlockSpec((1, OUT_LANES), resident),            # inv_var (padded)
            pl.BlockSpec((S, 2 * H1), resident),               # w1p
            pl.BlockSpec((1, 2 * H1), resident),               # b1p
            pl.BlockSpec((2 * H1, 2 * H2), resident),          # w2p
            pl.BlockSpec((1, 2 * H2), resident),               # b2p
            pl.BlockSpec((2 * H2, OUT_LANES), resident),       # w3p
            pl.BlockSpec((1, OUT_LANES), resident),            # b3p
        ],
        out_specs=pl.BlockSpec((TB, OUT_LANES), lambda i: (i, 0)),
        compiler_params=pltpu.CompilerParams(
            dimension_semantics=("parallel",)),                # shards across v7x's 2 TCs
    )(state_p, action_p, inv_var_p,
      packed["w1p"], packed["b1p"], packed["w2p"], packed["b2p"],
      packed["w3p"], packed["b3p"])

    mean = out[:B, :A]
    value = out[:B, VAL_LANE]
    quad = out[:B, QUAD_LANE]

    # Constant Gaussian terms finished outside the kernel (scalar work).
    log2pi = math.log(2.0 * math.pi)
    logdet = jnp.sum(jnp.log(action_var))
    logp = -0.5 * (quad + A * log2pi + logdet)
    entropy = jnp.broadcast_to(0.5 * A * (1.0 + log2pi) + 0.5 * logdet, (B,))
    return logp, value, entropy, mean


# -----------------------------------------------------------------------------
# Deterministic parameter init (shapes from ActorCritic.__init__, NN_conf='tanh')
# -----------------------------------------------------------------------------
def init_params(key, state_dim, action_dim):
    def linear(key, fan_in, fan_out):
        kw, kb = jax.random.split(key)
        bound = 1.0 / math.sqrt(fan_in)
        w = jax.random.uniform(kw, (fan_in, fan_out), jnp.float32, -bound, bound)
        b = jax.random.uniform(kb, (1, fan_out), jnp.float32, -bound, bound)
        return w, b

    keys = jax.random.split(key, 6)
    aw1, ab1 = linear(keys[0], state_dim, H1)
    aw2, ab2 = linear(keys[1], H1, H2)
    aw3, ab3 = linear(keys[2], H2, action_dim)
    cw1, cb1 = linear(keys[3], state_dim, H1)
    cw2, cb2 = linear(keys[4], H1, H2)
    cw3, cb3 = linear(keys[5], H2, 1)
    return dict(aw1=aw1, ab1=ab1, aw2=aw2, ab2=ab2, aw3=aw3, ab3=ab3,
                cw1=cw1, cb1=cb1, cw2=cw2, cb2=cb2, cw3=cw3, cb3=cb3)


# Pure-JAX reference (mirrors the PyTorch module) for correctness checking.
def reference_evaluate(state, action, p, action_var):
    h = jnp.tanh(state @ p["aw1"] + p["ab1"])
    h = jnp.tanh(h @ p["aw2"] + p["ab2"])
    mean = jnp.tanh(h @ p["aw3"] + p["ab3"])
    hc = jnp.tanh(state @ p["cw1"] + p["cb1"])
    hc = jnp.tanh(hc @ p["cw2"] + p["cb2"])
    val = hc @ p["cw3"] + p["cb3"]
    d = action.shape[-1]
    diff = action - mean
    logp = (-0.5 * jnp.sum(diff * diff / action_var, axis=-1)
            - 0.5 * d * math.log(2.0 * math.pi)
            - 0.5 * jnp.sum(jnp.log(action_var)))
    ent = 0.5 * d * (1.0 + math.log(2.0 * math.pi)) + 0.5 * jnp.sum(jnp.log(action_var))
    return logp, val[:, 0], jnp.broadcast_to(ent, logp.shape), mean


if __name__ == "__main__":
    B, STATE_DIM, ACTION_DIM = 8, 16, 4
    ACTION_STD = 0.5

    key = jax.random.PRNGKey(0)
    k_param, k_state, k_action = jax.random.split(key, 3)

    params = init_params(k_param, STATE_DIM, ACTION_DIM)
    state = jax.random.normal(k_state, (B, STATE_DIM), jnp.float32)
    action = jax.random.normal(k_action, (B, ACTION_DIM), jnp.float32)
    action_var = jnp.full((ACTION_DIM,), ACTION_STD * ACTION_STD, jnp.float32)

    # ---- exact f32 path (matches PyTorch semantics) ----
    packed_f32 = pack_params(params, STATE_DIM, ACTION_DIM, jnp.float32)
    logp, value, entropy, mean = actor_critic_evaluate(state, action, packed_f32, action_var)
    jax.block_until_ready((logp, value, entropy, mean))

    r_logp, r_value, r_entropy, r_mean = reference_evaluate(state, action, params, action_var)
    assert jnp.allclose(mean, r_mean, atol=1e-5), "action_mean mismatch"
    assert jnp.allclose(logp, r_logp, atol=1e-4), "logprob mismatch"
    assert jnp.allclose(value, r_value, atol=1e-5), "state_value mismatch"
    assert jnp.allclose(entropy, r_entropy, atol=1e-5), "entropy mismatch"

    # ---- larger-batch, multi-tile, bf16-MXU path (v6e/v7x style); sanity only ----
    B2 = 1024
    k2s, k2a = jax.random.split(jax.random.PRNGKey(1))
    state2 = jax.random.normal(k2s, (B2, STATE_DIM), jnp.float32)
    action2 = jax.random.normal(k2a, (B2, ACTION_DIM), jnp.float32)
    packed_bf16 = pack_params(params, STATE_DIM, ACTION_DIM, jnp.bfloat16)
    lp2, v2, e2, m2 = actor_critic_evaluate(state2, action2, packed_bf16, action_var)
    jax.block_until_ready((lp2, v2, e2, m2))
    assert bool(jnp.all(jnp.isfinite(lp2))) and bool(jnp.all(jnp.isfinite(v2)))
    assert bool(jnp.all(jnp.isfinite(m2)))

    # TODO(synk): act()'s stochastic dist.sample() path uses host/JAX-side RNG and is
    # intentionally not implemented in the kernel (evaluate() is the forward pass).
    print("KERNEL_OK")
</pallas_src>

<mosaic_0001>
module attributes {stable_mosaic.version = 11 : i64} {
  func.func @actor_critic_fused_kernel(%arg0: i32, %arg1: memref<8x16xf32, #tpu.memory_space<vmem>>, %arg2: memref<8x128xf32, #tpu.memory_space<vmem>>, %arg3: memref<1x128xf32, #tpu.memory_space<vmem>>, %arg4: memref<16x256xf32, #tpu.memory_space<vmem>>, %arg5: memref<1x256xf32, #tpu.memory_space<vmem>>, %arg6: memref<256x128xf32, #tpu.memory_space<vmem>>, %arg7: memref<1x128xf32, #tpu.memory_space<vmem>>, %arg8: memref<128x128xf32, #tpu.memory_space<vmem>>, %arg9: memref<1x128xf32, #tpu.memory_space<vmem>>, %arg10: memref<8x128xf32, #tpu.memory_space<vmem>>) attributes {dimension_semantics = [#tpu.dimension_semantics<parallel>], iteration_bounds = array<i64: 1>, scalar_prefetch = 0 : i64, scratch_operands = 0 : i64, tpu.core_type = #tpu.core_type<tc>, window_params = [{transform_indices = @transform_0, window_bounds = array<i64: 8, 16>}, {transform_indices = @transform_1, window_bounds = array<i64: 8, 128>}, {pipeline_mode = #tpu.pipeline_mode<synchronous>, transform_indices = @transform_2, window_bounds = array<i64: 1, 128>}, {pipeline_mode = #tpu.pipeline_mode<synchronous>, transform_indices = @transform_3, window_bounds = array<i64: 16, 256>}, {pipeline_mode = #tpu.pipeline_mode<synchronous>, transform_indices = @transform_4, window_bounds = array<i64: 1, 256>}, {pipeline_mode = #tpu.pipeline_mode<synchronous>, transform_indices = @transform_5, window_bounds = array<i64: 256, 128>}, {pipeline_mode = #tpu.pipeline_mode<synchronous>, transform_indices = @transform_6, window_bounds = array<i64: 1, 128>}, {pipeline_mode = #tpu.pipeline_mode<synchronous>, transform_indices = @transform_7, window_bounds = array<i64: 128, 128>}, {pipeline_mode = #tpu.pipeline_mode<synchronous>, transform_indices = @transform_8, window_bounds = array<i64: 1, 128>}, {transform_indices = @transform_9, window_bounds = array<i64: 8, 128>}]} {
    %c0 = arith.constant 0 : index
    %c0_0 = arith.constant 0 : index
    %0 = vector.load %arg1[%c0, %c0_0] : memref<8x16xf32, #tpu.memory_space<vmem>>, vector<8x16xf32>
    %c0_1 = arith.constant 0 : index
    %c0_2 = arith.constant 0 : index
    %1 = vector.load %arg4[%c0_1, %c0_2] : memref<16x256xf32, #tpu.memory_space<vmem>>, vector<16x256xf32>
    %c0_3 = arith.constant 0 : index
    %c0_4 = arith.constant 0 : index
    %2 = vector.load %arg6[%c0_3, %c0_4] : memref<256x128xf32, #tpu.memory_space<vmem>>, vector<256x128xf32>
    %c0_5 = arith.constant 0 : index
    %c0_6 = arith.constant 0 : index
    %3 = vector.load %arg8[%c0_5, %c0_6] : memref<128x128xf32, #tpu.memory_space<vmem>>, vector<128x128xf32>
    %cst = arith.constant dense<0.000000e+00> : vector<8x256xf32>
    %4 = tpu.matmul %0, %1, %cst {dimension_numbers = #tpu.dot_dimension_numbers<[1], [0], [0], [1], [0, 0, 1, 1], [], []>} : vector<8x16xf32>, vector<16x256xf32>, vector<8x256xf32> -> vector<8x256xf32>
    %c0_7 = arith.constant 0 : index
    %c0_8 = arith.constant 0 : index
    %5 = vector.load %arg5[%c0_7, %c0_8] : memref<1x256xf32, #tpu.memory_space<vmem>>, vector<1x256xf32>
    %6 = vector.broadcast %5 : vector<1x256xf32> to vector<8x256xf32>
    %7 = arith.addf %4, %6 : vector<8x256xf32>
    %8 = math.tanh %7 : vector<8x256xf32>
    %cst_9 = arith.constant dense<0.000000e+00> : vector<8x128xf32>
    %9 = tpu.matmul %8, %2, %cst_9 {dimension_numbers = #tpu.dot_dimension_numbers<[1], [0], [0], [1], [0, 0, 1, 1], [], []>} : vector<8x256xf32>, vector<256x128xf32>, vector<8x128xf32> -> vector<8x128xf32>
    %c0_10 = arith.constant 0 : index
    %c0_11 = arith.constant 0 : index
    %10 = vector.load %arg7[%c0_10, %c0_11] : memref<1x128xf32, #tpu.memory_space<vmem>>, vector<1x128xf32>
    %11 = vector.broadcast %10 : vector<1x128xf32> to vector<8x128xf32>
    %12 = arith.addf %9, %11 : vector<8x128xf32>
    %13 = math.tanh %12 : vector<8x128xf32>
    %cst_12 = arith.constant dense<0.000000e+00> : vector<8x128xf32>
    %14 = tpu.matmul %13, %3, %cst_12 {dimension_numbers = #tpu.dot_dimension_numbers<[1], [0], [0], [1], [0, 0, 1, 1], [], []>} : vector<8x128xf32>, vector<128x128xf32>, vector<8x128xf32> -> vector<8x128xf32>
    %c0_13 = arith.constant 0 : index
    %c0_14 = arith.constant 0 : index
    %15 = vector.load %arg9[%c0_13, %c0_14] : memref<1x128xf32, #tpu.memory_space<vmem>>, vector<1x128xf32>
    %16 = vector.broadcast %15 : vector<1x128xf32> to vector<8x128xf32>
    %17 = arith.addf %14, %16 : vector<8x128xf32>
    %18 = tpu.iota {dimensions = array<i32: 1>} : vector<8x128xi32>
    %c4_i32 = arith.constant 4 : i32
    %19 = vector.broadcast %c4_i32 : i32 to vector<8x128xi32>
    %20 = arith.cmpi slt, %18, %19 : vector<8x128xi32>
    %21 = math.tanh %17 : vector<8x128xf32>
    %22 = arith.select %20, %21, %17 : vector<8x128xi1>, vector<8x128xf32>
    %c0_15 = arith.constant 0 : index
    %c0_16 = arith.constant 0 : index
    %23 = vector.load %arg2[%c0_15, %c0_16] : memref<8x128xf32, #tpu.memory_space<vmem>>, vector<8x128xf32>
    %24 = arith.subf %23, %22 : vector<8x128xf32>
    %25 = arith.mulf %24, %24 : vector<8x128xf32>
    %c0_17 = arith.constant 0 : index
    %c0_18 = arith.constant 0 : index
    %26 = vector.load %arg3[%c0_17, %c0_18] : memref<1x128xf32, #tpu.memory_space<vmem>>, vector<1x128xf32>
    %27 = vector.broadcast %26 : vector<1x128xf32> to vector<8x128xf32>
    %28 = arith.mulf %25, %27 : vector<8x128xf32>
    %cst_19 = arith.constant dense<0.000000e+00> : vector<8xf32>
    %29 = vector.multi_reduction <add>, %28, %cst_19 [1] : vector<8x128xf32> to vector<8xf32>
    %30 = vector.shape_cast %29 : vector<8xf32> to vector<8x1xf32>
    %c127_i32 = arith.constant 127 : i32
    %31 = vector.broadcast %c127_i32 : i32 to vector<8x128xi32>
    %32 = arith.cmpi eq, %18, %31 : vector<8x128xi32>
    %33 = vector.shape_cast %30 : vector<8x1xf32> to vector<8x1xf32>
    %34 = vector.broadcast %33 : vector<8x1xf32> to vector<8x128xf32>
    %35 = arith.select %32, %34, %22 : vector<8x128xi1>, vector<8x128xf32>
    %c0_20 = arith.constant 0 : index
    %c0_21 = arith.constant 0 : index
    %36 = vector.load %arg10[%c0_20, %c0_21] : memref<8x128xf32, #tpu.memory_space<vmem>>, vector<8x128xf32>
    tpu.vector_store %arg10[%c0_20, %c0_21], %35 {strides = array<i32>} : memref<8x128xf32, #tpu.memory_space<vmem>>, vector<8x128xf32>,
    return
  }
  func.func @transform_0(%arg0: i32) -> (i32, i32) {
    %c0_i32 = arith.constant 0 : i32
    %c0_i32_0 = arith.constant 0 : i32
    return %arg0, %c0_i32 : i32, i32
  }
  func.func @transform_1(%arg0: i32) -> (i32, i32) {
    %c0_i32 = arith.constant 0 : i32
    %c0_i32_0 = arith.constant 0 : i32
    return %arg0, %c0_i32 : i32, i32
  }
  func.func @transform_2(%arg0: i32) -> (i32, i32) {
    %c0_i32 = arith.constant 0 : i32
    %c0_i32_0 = arith.constant 0 : i32
    %c0_i32_1 = arith.constant 0 : i32
    return %c0_i32, %c0_i32_0 : i32, i32
  }
  func.func @transform_3(%arg0: i32) -> (i32, i32) {
    %c0_i32 = arith.constant 0 : i32
    %c0_i32_0 = arith.constant 0 : i32
    %c0_i32_1 = arith.constant 0 : i32
    return %c0_i32, %c0_i32_0 : i32, i32
  }
  func.func @transform_4(%arg0: i32) -> (i32, i32) {
    %c0_i32 = arith.constant 0 : i32
    %c0_i32_0 = arith.constant 0 : i32
    %c0_i32_1 = arith.constant 0 : i32
    return %c0_i32, %c0_i32_0 : i32, i32
  }
  func.func @transform_5(%arg0: i32) -> (i32, i32) {
    %c0_i32 = arith.constant 0 : i32
    %c0_i32_0 = arith.constant 0 : i32
    %c0_i32_1 = arith.constant 0 : i32
    return %c0_i32, %c0_i32_0 : i32, i32
  }
  func.func @transform_6(%arg0: i32) -> (i32, i32) {
    %c0_i32 = arith.constant 0 : i32
    %c0_i32_0 = arith.constant 0 : i32
    %c0_i32_1 = arith.constant 0 : i32
    return %c0_i32, %c0_i32_0 : i32, i32
  }
  func.func @transform_7(%arg0: i32) -> (i32, i32) {
    %c0_i32 = arith.constant 0 : i32
    %c0_i32_0 = arith.constant 0 : i32
    %c0_i32_1 = arith.constant 0 : i32
    return %c0_i32, %c0_i32_0 : i32, i32
  }
  func.func @transform_8(%arg0: i32) -> (i32, i32) {
    %c0_i32 = arith.constant 0 : i32
    %c0_i32_0 = arith.constant 0 : i32
    %c0_i32_1 = arith.constant 0 : i32
    return %c0_i32, %c0_i32_0 : i32, i32
  }
  func.func @transform_9(%arg0: i32) -> (i32, i32) {
    %c0_i32 = arith.constant 0 : i32
    %c0_i32_0 = arith.constant 0 : i32
    return %arg0, %c0_i32 : i32, i32
  }
}

</mosaic_0001>

<llo_original>
// kernel: actor_critic_evaluate.1
$region0: #{actor_critic_evaluate.1}
  #allocation0 [shape = 'u32[]', space=smem, size = 0x4, offset = 0x4, fixed_abs, tag = 'smem constant byte address 0x4 - core index']
  #allocation1 [shape = 'u32[144,128]{1,0:T(1,128)}', space=vmem, size = 0x12000, scoped, tag = 'internal scratch']
  %s0 = inlined_call_operand.vmem [shape: f32[8,16], index: 0, kind: input, shape index: {}]
  %s1 = inlined_call_operand.vmem [shape: f32[8,128], index: 1, kind: input, shape index: {}]
  %s2 = inlined_call_operand.vmem [shape: f32[1,128], index: 2, kind: input, shape index: {}]
  %s3 = inlined_call_operand.vmem [shape: f32[16,256], index: 3, kind: input, shape index: {}]
  %s4 = inlined_call_operand.vmem [shape: f32[1,256], index: 4, kind: input, shape index: {}]
  %s5 = inlined_call_operand.hbm [shape: f32[256,128], index: 5, kind: input, shape index: {}]
  %s6 = inlined_call_operand.vmem [shape: f32[1,128], index: 6, kind: input, shape index: {}]
  %s7 = inlined_call_operand.hbm [shape: f32[128,128], index: 7, kind: input, shape index: {}]
  %s8 = inlined_call_operand.hbm [shape: f32[1,128], index: 8, kind: input, shape index: {}]
  %s9 = inlined_call_operand.vmem [shape: f32[8,128], index: 9, kind: output, shape index: {}]
  %s10 = sld [smem:[#allocation0]]
  $region58: #{actor_critic_evaluate.1} parent=0
    _
  %s12 = ssub.s32 1, %s10
  %s13 = scalar_select 0, %s12, %s10
  $region1: #{actor_critic_evaluate.1} parent=0
    #allocation2 [shape = 'u8[131072]{0}', space=vmem, size = 0x20000, scoped, tag = 'input window, operand 5, single buffered']
    #allocation3 [shape = 's32[1]{0}', space=sflag, size = 0x4, scoped, tag = 'scoped memory for actor_critic_evaluate.1']
    #allocation4 [shape = 'u8[65536]{0}', space=vmem, size = 0x10000, scoped, tag = 'input window, operand 7, single buffered']
    #allocation5 [shape = 's32[1]{0}', space=sflag, size = 0x4, scoped, tag = 'scoped memory for actor_critic_evaluate.1']
    #allocation6 [shape = 'u8[512]{0}', space=vmem, size = 0x400, scoped, tag = 'input window, operand 8, single buffered']
    %14 = vsyncpa [#allocation3], 0
    %15 = vsyncpa [#allocation5], 0
    // Predicated region
    $region2: #{actor_critic_evaluate.1} parent=1 // pred_check
      _
    $region3: #{actor_critic_evaluate.1} parent=1 // pred_check_branch
      %17 = sbr.rel (0) target = $region5
    $region4: #{actor_critic_evaluate.1} parent=1 // pred_region
      _
    $region5: #{actor_critic_evaluate.1} parent=1 // pred_fallthru
      _
    // Predicated region
    $region6: #{actor_critic_evaluate.1} parent=1 // pred_check
      _
    $region7: #{actor_critic_evaluate.1} parent=1 // pred_check_branch
      %19 = sbr.rel (0) target = $region9
    $region8: #{actor_critic_evaluate.1} parent=1 // pred_region
      _
    $region9: #{actor_critic_evaluate.1} parent=1 // pred_fallthru
      _
    // Predicated region
    $region10: #{actor_critic_evaluate.1} parent=1 // pred_check
      _
    $region11: #{actor_critic_evaluate.1} parent=1 // pred_check_branch
      %21 = sbr.rel (0) target = $region13
    $region12: #{actor_critic_evaluate.1} parent=1 // pred_region
      _
    $region13: #{actor_critic_evaluate.1} parent=1 // pred_fallthru
      _
    // Predicated region
    $region14: #{actor_critic_evaluate.1} parent=1 // pred_check
      _
    $region15: #{actor_critic_evaluate.1} parent=1 // pred_check_branch
      %23 = sbr.rel (0) target = $region17
    $region16: #{actor_critic_evaluate.1} parent=1 // pred_region
      _
    $region17: #{actor_critic_evaluate.1} parent=1 // pred_fallthru
      _
    // Predicated region
    $region18: #{actor_critic_evaluate.1} parent=1 // pred_check
      _
    $region19: #{actor_critic_evaluate.1} parent=1 // pred_check_branch
      %25 = sbr.rel (0) target = $region21
    $region20: #{actor_critic_evaluate.1} parent=1 // pred_region
      _
    $region21: #{actor_critic_evaluate.1} parent=1 // pred_fallthru
      _
    // Predicated region
    $region22: #{actor_critic_evaluate.1} parent=1 // pred_check
      _
    $region23: #{actor_critic_evaluate.1} parent=1 // pred_check_branch
      %27 = sbr.rel (0) target = $region25
    $region24: #{actor_critic_evaluate.1} parent=1 // pred_region
      %s29 = ssub.s32 4096, 4096
      %30 = vsyncadd [#allocation3], %s29
      %s31 = sshll.u32 [#allocation2], 4
      %s32 = int_to_ptr.vmem [resolvable:$true] %s31
      %37 = dma.hbm_to_vmem [thread:$0]  %s5, 4096, %s32, [#allocation3], 128, 128, 8
    $region25: #{actor_critic_evaluate.1} parent=1 // pred_fallthru
      _
    // Predicated region
    $region26: #{actor_critic_evaluate.1} parent=1 // pred_check
      _
    $region27: #{actor_critic_evaluate.1} parent=1 // pred_check_branch
      %39 = sbr.rel (0) target = $region29
    $region28: #{actor_critic_evaluate.1} parent=1 // pred_region
      _
    $region29: #{actor_critic_evaluate.1} parent=1 // pred_fallthru
      _
    // Predicated region
    $region30: #{actor_critic_evaluate.1} parent=1 // pred_check
      _
    $region31: #{actor_critic_evaluate.1} parent=1 // pred_check_branch
      %41 = sbr.rel (0) target = $region33
    $region32: #{actor_critic_evaluate.1} parent=1 // pred_region
      %s43 = ssub.s32 2048, 2048
      %44 = vsyncadd [#allocation5], %s43
      %s45 = sshll.u32 [#allocation4], 4
      %s46 = int_to_ptr.vmem [resolvable:$true] %s45
      %51 = dma.hbm_to_vmem [thread:$0]  %s7, 2048, %s46, [#allocation5], 128, 128, 8
    $region33: #{actor_critic_evaluate.1} parent=1 // pred_fallthru
      _
    // Predicated region
    $region34: #{actor_critic_evaluate.1} parent=1 // pred_check
      _
    $region35: #{actor_critic_evaluate.1} parent=1 // pred_check_branch
      %53 = sbr.rel (0) target = $region37
    $region36: #{actor_critic_evaluate.1} parent=1 // pred_region
      %s55 = ssub.s32 16, 16
      %56 = vsyncadd [#allocation5], %s55
      %s58 = sshll.u32 [#allocation6], 4
      %s59 = int_to_ptr.vmem [resolvable:$true] %s58
      %61 = dma.hbm_to_vmem [thread:$0]  %s8, 16, %s59, [#allocation5]
    $region37: #{actor_critic_evaluate.1} parent=1 // pred_fallthru
      _
    // Predicated region
    $region38: #{actor_critic_evaluate.1} parent=1 // pred_check
      _
    $region39: #{actor_critic_evaluate.1} parent=1 // pred_check_branch
      %63 = sbr.rel (0) target = $region41
    $region40: #{actor_critic_evaluate.1} parent=1 // pred_region
      %64 = dma.done [#allocation3], 4096
    $region41: #{actor_critic_evaluate.1} parent=1 // pred_fallthru
      _
    // Predicated region
    $region42: #{actor_critic_evaluate.1} parent=1 // pred_check
      _
    $region43: #{actor_critic_evaluate.1} parent=1 // pred_check_branch
      %66 = sbr.rel (0) target = $region45
    $region44: #{actor_critic_evaluate.1} parent=1 // pred_region
      %67 = dma.done [#allocation5], 2048
    $region45: #{actor_critic_evaluate.1} parent=1 // pred_fallthru
      _
    // Predicated region
    $region46: #{actor_critic_evaluate.1} parent=1 // pred_check
      _
    $region47: #{actor_critic_evaluate.1} parent=1 // pred_check_branch
      %69 = sbr.rel (0) target = $region49
    $region48: #{actor_critic_evaluate.1} parent=1 // pred_region
      %70 = dma.done [#allocation5], 16
    $region49: #{actor_critic_evaluate.1} parent=1 // pred_fallthru
      _
    %v71 = vld [vmem:[%s0] sm:$0xff]
    %v72 = vld [vmem:[%s3] sm:$0xff]
    %v73 = vld [vmem:[%s3 + $0x8] sm:$0xff]
    %v74 = vld [vmem:[%s3 + $0x10] sm:$0xff]
    %v75 = vld [vmem:[%s3 + $0x18] sm:$0xff]
    %v76 = vld [vmem:[#allocation2] sm:$0xff]
    %v77 = vld [vmem:[#allocation2 + $0x8] sm:$0xff]
    %v78 = vld [vmem:[#allocation2 + $0x10] sm:$0xff]
    %v79 = vld [vmem:[#allocation2 + $0x18] sm:$0xff]
    %v80 = vld [vmem:[#allocation2 + $0x20] sm:$0xff]
    %v81 = vld [vmem:[#allocation2 + $0x28] sm:$0xff]
    %v82 = vld [vmem:[#allocation2 + $0x30] sm:$0xff]
    %v83 = vld [vmem:[#allocation2 + $0x38] sm:$0xff]
    %v84 = vld [vmem:[#allocation2 + $0x40] sm:$0xff]
    %v85 = vld [vmem:[#allocation2 + $0x48] sm:$0xff]
    %v86 = vld [vmem:[#allocation2 + $0x50] sm:$0xff]
    %v87 = vld [vmem:[#allocation2 + $0x58] sm:$0xff]
    %v88 = vld [vmem:[#allocation2 + $0x60] sm:$0xff]
    %v89 = vld [vmem:[#allocation2 + $0x68] sm:$0xff]
    %v90 = vld [vmem:[#allocation2 + $0x70] sm:$0xff]
    %v91 = vld [vmem:[#allocation2 + $0x78] sm:$0xff]
    %v92 = vld [vmem:[#allocation2 + $0x80] sm:$0xff]
    %v93 = vld [vmem:[#allocation2 + $0x88] sm:$0xff]
    %v94 = vld [vmem:[#allocation2 + $0x90] sm:$0xff]
    %v95 = vld [vmem:[#allocation2 + $0x98] sm:$0xff]
    %v96 = vld [vmem:[#allocation2 + $0xa0] sm:$0xff]
    %v97 = vld [vmem:[#allocation2 + $0xa8] sm:$0xff]
    %v98 = vld [vmem:[#allocation2 + $0xb0] sm:$0xff]
    %v99 = vld [vmem:[#allocation2 + $0xb8] sm:$0xff]
    %v100 = vld [vmem:[#allocation2 + $0xc0] sm:$0xff]
    %v101 = vld [vmem:[#allocation2 + $0xc8] sm:$0xff]
    %v102 = vld [vmem:[#allocation2 + $0xd0] sm:$0xff]
    %v103 = vld [vmem:[#allocation2 + $0xd8] sm:$0xff]
    %v104 = vld [vmem:[#allocation2 + $0xe0] sm:$0xff]
    %v105 = vld [vmem:[#allocation2 + $0xe8] sm:$0xff]
    %v106 = vld [vmem:[#allocation2 + $0xf0] sm:$0xff]
    %v107 = vld [vmem:[#allocation2 + $0xf8] sm:$0xff]
    %v108 = vld [vmem:[#allocation4] sm:$0xff]
    %v109 = vld [vmem:[#allocation4 + $0x8] sm:$0xff]
    %v110 = vld [vmem:[#allocation4 + $0x10] sm:$0xff]
    %v111 = vld [vmem:[#allocation4 + $0x18] sm:$0xff]
    %v112 = vld [vmem:[#allocation4 + $0x20] sm:$0xff]
    %v113 = vld [vmem:[#allocation4 + $0x28] sm:$0xff]
    %v114 = vld [vmem:[#allocation4 + $0x30] sm:$0xff]
    %v115 = vld [vmem:[#allocation4 + $0x38] sm:$0xff]
    %v116 = vld [vmem:[#allocation4 + $0x40] sm:$0xff]
    %v117 = vld [vmem:[#allocation4 + $0x48] sm:$0xff]
    %v118 = vld [vmem:[#allocation4 + $0x50] sm:$0xff]
    %v119 = vld [vmem:[#allocation4 + $0x58] sm:$0xff]
    %v120 = vld [vmem:[#allocation4 + $0x60] sm:$0xff]
    %v121 = vld [vmem:[#allocation4 + $0x68] sm:$0xff]
    %v122 = vld [vmem:[#allocation4 + $0x70] sm:$0xff]
    %v123 = vld [vmem:[#allocation4 + $0x78] sm:$0xff]
    %v124 = vld [vmem:[%s4] sm:$0x3]
    %v126 = vlaneseq
    %v127 = vshrl.u32 %v126, 7
    %v128 = vsub.s32 0, %v127
    %v129 = vrot.slane %v124, %v128
    %v130 = vlaneseq
    %v131 = vshrl.u32 %v130, 7
    %v132 = vsub.s32 1, %v131
    %v133 = vrot.slane %v124, %v132
    %vm136 = vcmask 130048
    %v138 = vsel %vm136, %v71, 0
    %140 = vmatprep.subr.mxu0 0.0
    %141 = vmatpush1.msra.mxu0 0.0
    %142 = vmatprep.subr.mxu0 0.0
    %143 = vmatpush1.msra.mxu0 0.0
    %144 = vmatprep.subr.mxu0 0.0
    %145 = vmatpush1.msra.mxu0 0.0
    %146 = vmatprep.subr.mxu0 0.0
    %147 = vmatpush1.msra.mxu0 0.0
    %148 = vmatprep.subr.mxu0 0.0
    %149 = vmatpush1.msra.mxu0 0.0
    %150 = vmatprep.subr.mxu0 0.0
    %151 = vmatpush1.msra.mxu0 0.0
    %152 = vmatprep.subr.mxu0 0.0
    %153 = vmatpush1.msra.mxu0 0.0
    %154 = vmatprep.subr.mxu0 0.0
    %155 = vmatpush1.msra.mxu0 0.0
    %156 = vmatprep.subr.mxu0 0.0
    %157 = vmatpush1.msra.mxu0 0.0
    %158 = vmatprep.subr.mxu0 0.0
    %159 = vmatpush1.msra.mxu0 0.0
    %160 = vmatprep.subr.mxu0 0.0
    %161 = vmatpush1.msra.mxu0 0.0
    %162 = vmatprep.subr.mxu0 0.0
    %163 = vmatpush1.msra.mxu0 0.0
    %164 = vmatprep.subr.mxu0 0.0
    %165 = vmatpush1.msra.mxu0 0.0
    %166 = vmatprep.subr.mxu0 0.0
    %167 = vmatpush1.msra.mxu0 0.0
    %168 = vmatprep.subr.mxu0 %v75
    %169 = vmatpush1.msra.mxu0 %v74
    %170 = vmatprep.subr.mxu0 %v73
    %171 = vmatpush1.msra.mxu0 %v72
    %172 = vmatprep.subr.mxu0 0.0
    %173 = vmatpush2.msra.mxu0 0.0
    %174 = vmatprep.subr.mxu0 0.0
    %175 = vmatpush2.msra.mxu0 0.0
    %176 = vmatprep.subr.mxu0 0.0
    %177 = vmatpush2.msra.mxu0 0.0
    %178 = vmatprep.subr.mxu0 0.0
    %179 = vmatpush2.msra.mxu0 0.0
    %180 = vmatprep.subr.mxu0 0.0
    %181 = vmatpush2.msra.mxu0 0.0
    %182 = vmatprep.subr.mxu0 0.0
    %183 = vmatpush2.msra.mxu0 0.0
    %184 = vmatprep.subr.mxu0 0.0
    %185 = vmatpush2.msra.mxu0 0.0
    %186 = vmatprep.subr.mxu0 0.0
    %187 = vmatpush2.msra.mxu0 0.0
    %188 = vmatprep.subr.mxu0 0.0
    %189 = vmatpush2.msra.mxu0 0.0
    %190 = vmatprep.subr.mxu0 0.0
    %191 = vmatpush2.msra.mxu0 0.0
    %192 = vmatprep.subr.mxu0 0.0
    %193 = vmatpush2.msra.mxu0 0.0
    %194 = vmatprep.subr.mxu0 0.0
    %195 = vmatpush2.msra.mxu0 0.0
    %196 = vmatprep.subr.mxu0 0.0
    %197 = vmatpush2.msra.mxu0 0.0
    %198 = vmatprep.subr.mxu0 0.0
    %199 = vmatpush2.msra.mxu0 0.0
    %200 = vmatprep.subr.mxu0 0.0
    %201 = vmatpush2.msra.mxu0 0.0
    %202 = vmatprep.subr.mxu0 0.0
    %203 = vmatpush2.msra.mxu0 0.0
    %204 = vmatprep.mubr.f32.mxu0 0.0
    %205 = vmatmul.mubr.f32.gmra.mxu0 %v138
    %v206 = vpop.f32.mrf.mxu0
    %v207 = vadd.f32 %v129, %v206
    %v208 = vpop.f32.mrf.mxu0
    %v209 = vadd.f32 %v133, %v208
    %210 = vdwg.mxu0
    %v211 = vtanh.pop %v207
    %v212 = vtanh.pop %v209
    %v213 = vld [vmem:[%s6] sm:$0x1]
    %v215 = vlaneseq
    %v216 = vshrl.u32 %v215, 7
    %v217 = vsub.s32 0, %v216
    %v218 = vrot.slane %v213, %v217
    %220 = vmatprep.subr.mxu0 0.0
    %221 = vmatpush1.msra.mxu0 %v91
    %222 = vmatprep.subr.mxu0 0.0
    %223 = vmatpush1.msra.mxu0 %v90
    %224 = vmatprep.subr.mxu0 0.0
    %225 = vmatpush1.msra.mxu0 %v89
    %226 = vmatprep.subr.mxu0 0.0
    %227 = vmatpush1.msra.mxu0 %v88
    %228 = vmatprep.subr.mxu0 0.0
    %229 = vmatpush1.msra.mxu0 %v87
    %230 = vmatprep.subr.mxu0 0.0
    %231 = vmatpush1.msra.mxu0 %v86
    %232 = vmatprep.subr.mxu0 0.0
    %233 = vmatpush1.msra.mxu0 %v85
    %234 = vmatprep.subr.mxu0 0.0
    %235 = vmatpush1.msra.mxu0 %v84
    %236 = vmatprep.subr.mxu0 0.0
    %237 = vmatpush1.msra.mxu0 %v83
    %238 = vmatprep.subr.mxu0 0.0
    %239 = vmatpush1.msra.mxu0 %v82
    %240 = vmatprep.subr.mxu0 0.0
    %241 = vmatpush1.msra.mxu0 %v81
    %242 = vmatprep.subr.mxu0 0.0
    %243 = vmatpush1.msra.mxu0 %v80
    %244 = vmatprep.subr.mxu0 0.0
    %245 = vmatpush1.msra.mxu0 %v79
    %246 = vmatprep.subr.mxu0 0.0
    %247 = vmatpush1.msra.mxu0 %v78
    %248 = vmatprep.subr.mxu0 0.0
    %249 = vmatpush1.msra.mxu0 %v77
    %250 = vmatprep.subr.mxu0 0.0
    %251 = vmatpush1.msra.mxu0 %v76
    %252 = vmatprep.subr.mxu0 0.0
    %253 = vmatpush2.msra.mxu0 %v107
    %254 = vmatprep.subr.mxu0 0.0
    %255 = vmatpush2.msra.mxu0 %v106
    %256 = vmatprep.subr.mxu0 0.0
    %257 = vmatpush2.msra.mxu0 %v105
    %258 = vmatprep.subr.mxu0 0.0
    %259 = vmatpush2.msra.mxu0 %v104
    %260 = vmatprep.subr.mxu0 0.0
    %261 = vmatpush2.msra.mxu0 %v103
    %262 = vmatprep.subr.mxu0 0.0
    %263 = vmatpush2.msra.mxu0 %v102
    %264 = vmatprep.subr.mxu0 0.0
    %265 = vmatpush2.msra.mxu0 %v101
    %266 = vmatprep.subr.mxu0 0.0
    %267 = vmatpush2.msra.mxu0 %v100
    %268 = vmatprep.subr.mxu0 0.0
    %269 = vmatpush2.msra.mxu0 %v99
    %270 = vmatprep.subr.mxu0 0.0
    %271 = vmatpush2.msra.mxu0 %v98
    %272 = vmatprep.subr.mxu0 0.0
    %273 = vmatpush2.msra.mxu0 %v97
    %274 = vmatprep.subr.mxu0 0.0
    %275 = vmatpush2.msra.mxu0 %v96
    %276 = vmatprep.subr.mxu0 0.0
    %277 = vmatpush2.msra.mxu0 %v95
    %278 = vmatprep.subr.mxu0 0.0
    %279 = vmatpush2.msra.mxu0 %v94
    %280 = vmatprep.subr.mxu0 0.0
    %281 = vmatpush2.msra.mxu0 %v93
    %282 = vmatprep.subr.mxu0 0.0
    %283 = vmatpush2.msra.mxu0 %v92
    %284 = vmatprep.mubr.f32.mxu0 %v212
    %285 = vmatmul.mubr.f32.gmra.mxu0 %v211
    %v286 = vpop.f32.mrf.mxu0
    %v287 = vadd.f32 %v218, %v286
    %v288 = vpop.f32.mrf.mxu0
    %289 = vdwg.mxu0
    %v290 = vtanh.pop %v287
    %v291 = vld [vmem:[#allocation6] sm:$0x1]
    %v293 = vlaneseq
    %v294 = vshrl.u32 %v293, 7
    %v295 = vsub.s32 0, %v294
    %v296 = vrot.slane %v291, %v295
    %298 = vmatprep.subr.mxu0 0.0
    %299 = vmatpush1.msra.mxu0 %v123
    %300 = vmatprep.subr.mxu0 0.0
    %301 = vmatpush1.msra.mxu0 %v122
    %302 = vmatprep.subr.mxu0 0.0
    %303 = vmatpush1.msra.mxu0 %v121
    %304 = vmatprep.subr.mxu0 0.0
    %305 = vmatpush1.msra.mxu0 %v120
    %306 = vmatprep.subr.mxu0 0.0
    %307 = vmatpush1.msra.mxu0 %v119
    %308 = vmatprep.subr.mxu0 0.0
    %309 = vmatpush1.msra.mxu0 %v118
    %310 = vmatprep.subr.mxu0 0.0
    %311 = vmatpush1.msra.mxu0 %v117
    %312 = vmatprep.subr.mxu0 0.0
    %313 = vmatpush1.msra.mxu0 %v116
    %314 = vmatprep.subr.mxu0 0.0
    %315 = vmatpush1.msra.mxu0 %v115
    %316 = vmatprep.subr.mxu0 0.0
    %317 = vmatpush1.msra.mxu0 %v114
    %318 = vmatprep.subr.mxu0 0.0
    %319 = vmatpush1.msra.mxu0 %v113
    %320 = vmatprep.subr.mxu0 0.0
    %321 = vmatpush1.msra.mxu0 %v112
    %322 = vmatprep.subr.mxu0 0.0
    %323 = vmatpush1.msra.mxu0 %v111
    %324 = vmatprep.subr.mxu0 0.0
    %325 = vmatpush1.msra.mxu0 %v110
    %326 = vmatprep.subr.mxu0 0.0
    %327 = vmatpush1.msra.mxu0 %v109
    %328 = vmatprep.subr.mxu0 0.0
    %329 = vmatpush1.msra.mxu0 %v108
    %330 = vmatprep.subr.mxu0 0.0
    %331 = vmatpush2.msra.mxu0 0.0
    %332 = vmatprep.subr.mxu0 0.0
    %333 = vmatpush2.msra.mxu0 0.0
    %334 = vmatprep.subr.mxu0 0.0
    %335 = vmatpush2.msra.mxu0 0.0
    %336 = vmatprep.subr.mxu0 0.0
    %337 = vmatpush2.msra.mxu0 0.0
    %338 = vmatprep.subr.mxu0 0.0
    %339 = vmatpush2.msra.mxu0 0.0
    %340 = vmatprep.subr.mxu0 0.0
    %341 = vmatpush2.msra.mxu0 0.0
    %342 = vmatprep.subr.mxu0 0.0
    %343 = vmatpush2.msra.mxu0 0.0
    %344 = vmatprep.subr.mxu0 0.0
    %345 = vmatpush2.msra.mxu0 0.0
    %346 = vmatprep.subr.mxu0 0.0
    %347 = vmatpush2.msra.mxu0 0.0
    %348 = vmatprep.subr.mxu0 0.0
    %349 = vmatpush2.msra.mxu0 0.0
    %350 = vmatprep.subr.mxu0 0.0
    %351 = vmatpush2.msra.mxu0 0.0
    %352 = vmatprep.subr.mxu0 0.0
    %353 = vmatpush2.msra.mxu0 0.0
    %354 = vmatprep.subr.mxu0 0.0
    %355 = vmatpush2.msra.mxu0 0.0
    %356 = vmatprep.subr.mxu0 0.0
    %357 = vmatpush2.msra.mxu0 0.0
    %358 = vmatprep.subr.mxu0 0.0
    %359 = vmatpush2.msra.mxu0 0.0
    %360 = vmatprep.subr.mxu0 0.0
    %361 = vmatpush2.msra.mxu0 0.0
    %362 = vmatprep.mubr.f32.mxu0 0.0
    %363 = vmatmul.mubr.f32.gmra.mxu0 %v290
    %v364 = vpop.f32.mrf.mxu0
    %v365 = vadd.f32 %v296, %v364
    %v366 = vpop.f32.mrf.mxu0
    %367 = vdwg.mxu0
    %v368 = vlaneseq
    %v369 = vand.u32 %v368, 127
    %vm370 = vcmp.lt.s32.totalorder %v369, 4
    %v371 = vtanh.pop %v365
    %v372 = vsel %vm370, %v371, %v365
    %v373 = vld [vmem:[%s1] sm:$0xff]
    %v374 = vsub.f32 %v373, %v372
    %v375 = vmul.f32 %v374, %v374
    %v376 = vld [vmem:[%s2] sm:$0x1]
    %v378 = vlaneseq
    %v379 = vshrl.u32 %v378, 7
    %v380 = vsub.s32 0, %v379
    %v381 = vrot.slane %v376, %v380
    %v383 = vmul.f32 %v375, %v381
    %384 = vadd.xlane.f32.xlu0 %v383
    %v385 = vpop.xlane.xlu0 %384
    %vm386 = vcmp.eq.s32.totalorder %v369, 127
    %v387 = vsel %vm386, %v385, %v372
    %388 = vst [vmem:[%s9] sm:$0xff] %v387
    // Predicated region
    $region50: #{actor_critic_evaluate.1} parent=1 // pred_check
      _
    $region51: #{actor_critic_evaluate.1} parent=1 // pred_check_branch
      %390 = sbr.rel (0) target = $region53
    $region52: #{actor_critic_evaluate.1} parent=1 // pred_region
      _
    $region53: #{actor_critic_evaluate.1} parent=1 // pred_fallthru
      _
    // Predicated region
    $region54: #{actor_critic_evaluate.1} parent=1 // pred_check
      _
    $region55: #{actor_critic_evaluate.1} parent=1 // pred_check_branch
      %392 = sbr.rel (0) target = $region57
    $region56: #{actor_critic_evaluate.1} parent=1 // pred_region
      _
    $region57: #{actor_critic_evaluate.1} parent=1 // pred_fallthru
      _
    %393 = vsyncpa [#allocation3], 1
    %394 = vsyncpa [#allocation5], 1

</llo_original>
